<compile_context>
chip_gen: v6e
topology: v6e:2x2x1
jax: 0.10.0
libtpu: 0.0.40
codegen_flags: <defaults>
</compile_context>

<pallas_src>
import jax
import jax.numpy as jnp
from jax.experimental import pallas as pl
from jax.experimental.pallas import tpu as pltpu


_TARGET_TILE_BYTES = 2 * 1024 * 1024  # 2 MiB per array tile (12 MiB working set)


def _kl_div_kernel(x_ref, y_ref, o_ref):
    # aten.kl_div(x, y, reduction='none', log_target=True): exp(y) * (y - x)
    x = x_ref[...]
    y = y_ref[...]
    o_ref[...] = jnp.exp(y) * (y - x)


def _round_up(a: int, b: int) -> int:
    return -(-a // b) * b


def kl_div_none_log_target(x: jax.Array, y: jax.Array) -> jax.Array:
    assert x.shape == y.shape and x.dtype == y.dtype
    orig_shape = x.shape
    n = x.size
    if n == 0:                       # degenerate empty input
        return jnp.zeros(orig_shape, x.dtype)

    itemsize = jnp.dtype(x.dtype).itemsize
    sub = max(8, 32 // itemsize)     # sublane multiple: 8 (f32), 16 (bf16), 32 (i8)

    # Choose the lane axis without any pad/slice (only free metadata reshapes).
    lane = None
    for cand in (512, 256, 128):     # widest lane-dense layout that divides n
        if n % cand == 0:
            lane = cand
            break
    if lane is None:                 # genuinely ragged last dim (e.g. 37)
        lane = orig_shape[-1]

    rows = n // lane
    x2 = x.reshape(rows, lane)
    y2 = y.reshape(rows, lane)

    # Byte-budgeted row tile; VMEM pads the lane axis to a multiple of 128.
    lane_padded = _round_up(lane, 128)
    budget_rows = max(sub, (_TARGET_TILE_BYTES // (lane_padded * itemsize)) // sub * sub)
    if rows <= sub:
        tm = rows                    # block == full array dims (always legal)
    else:
        # Split into >= 2 blocks so v7x's second TensorCore gets work; keep tm
        # a sublane multiple. Trailing partial block is masked by Pallas.
        half = _round_up(-(-rows // 2), sub)
        tm = min(budget_rows, half)
    grid = pl.cdiv(rows, tm)

    spec = pl.BlockSpec((tm, lane), lambda i: (i, 0))
    out2 = pl.pallas_call(
        _kl_div_kernel,
        out_shape=jax.ShapeDtypeStruct((rows, lane), x.dtype),
        grid=(grid,),
        in_specs=[spec, spec],
        out_specs=spec,
        compiler_params=pltpu.CompilerParams(
            dimension_semantics=("parallel",),
        ),
        cost_estimate=pl.CostEstimate(
            flops=2 * n,
            transcendentals=n,
            bytes_accessed=3 * n * itemsize,
        ),
    )(x2, y2)

    return out2.reshape(orig_shape)


if __name__ == "__main__":
    key = jax.random.PRNGKey(0)
    kx, ky = jax.random.split(key)

    # small 3-D shapes consistent with the module's ([-1, -1, -1], float32) inputs
    B, S, D = 4, 8, 128
    x = jax.random.normal(kx, (B, S, D), dtype=jnp.float32)  # log-probs (input)
    y = jax.random.normal(ky, (B, S, D), dtype=jnp.float32)  # log-probs (target)

    out = kl_div_none_log_target(x, y)
    jax.block_until_ready(out)
    ref = jnp.exp(y) * (y - x)
    assert out.shape == (B, S, D)
    assert jnp.allclose(out, ref, atol=1e-6, rtol=1e-6)

    # exercise the ragged path (last dim not a multiple of 128, odd sizes)
    kx2, ky2 = jax.random.split(ky)
    x2 = jax.random.normal(kx2, (3, 5, 37), dtype=jnp.float32)
    y2 = jax.random.normal(ky2, (3, 5, 37), dtype=jnp.float32)
    out2 = kl_div_none_log_target(x2, y2)
    jax.block_until_ready(out2)
    ref2 = jnp.exp(y2) * (y2 - x2)
    assert out2.shape == (3, 5, 37)
    assert jnp.allclose(out2, ref2, atol=1e-6, rtol=1e-6)

    print("KERNEL_OK")
</pallas_src>

<mosaic_0001>
module attributes {stable_mosaic.version = 11 : i64} {
  func.func @_kl_div_kernel(%arg0: i32, %arg1: memref<8x512xf32, #tpu.memory_space<vmem>>, %arg2: memref<8x512xf32, #tpu.memory_space<vmem>>, %arg3: memref<8x512xf32, #tpu.memory_space<vmem>>) attributes {dimension_semantics = [#tpu.dimension_semantics<parallel>], iteration_bounds = array<i64: 1>, scalar_prefetch = 0 : i64, scratch_operands = 0 : i64, tpu.core_type = #tpu.core_type<tc>, window_params = [{transform_indices = @transform_0, window_bounds = array<i64: 8, 512>}, {transform_indices = @transform_1, window_bounds = array<i64: 8, 512>}, {transform_indices = @transform_2, window_bounds = array<i64: 8, 512>}]} {
    %c0 = arith.constant 0 : index
    %c0_0 = arith.constant 0 : index
    %0 = vector.load %arg1[%c0, %c0_0] : memref<8x512xf32, #tpu.memory_space<vmem>>, vector<8x512xf32>
    %c0_1 = arith.constant 0 : index
    %c0_2 = arith.constant 0 : index
    %1 = vector.load %arg2[%c0_1, %c0_2] : memref<8x512xf32, #tpu.memory_space<vmem>>, vector<8x512xf32>
    %2 = math.exp %1 : vector<8x512xf32>
    %3 = arith.subf %1, %0 : vector<8x512xf32>
    %4 = arith.mulf %2, %3 : vector<8x512xf32>
    %c0_3 = arith.constant 0 : index
    %c0_4 = arith.constant 0 : index
    %5 = vector.load %arg3[%c0_3, %c0_4] : memref<8x512xf32, #tpu.memory_space<vmem>>, vector<8x512xf32>
    tpu.vector_store %arg3[%c0_3, %c0_4], %4 {strides = array<i32>} : memref<8x512xf32, #tpu.memory_space<vmem>>, vector<8x512xf32>,
    return
  }
  func.func @transform_0(%arg0: i32) -> (i32, i32) {
    %c0_i32 = arith.constant 0 : i32
    %c0_i32_0 = arith.constant 0 : i32
    return %arg0, %c0_i32 : i32, i32
  }
  func.func @transform_1(%arg0: i32) -> (i32, i32) {
    %c0_i32 = arith.constant 0 : i32
    %c0_i32_0 = arith.constant 0 : i32
    return %arg0, %c0_i32 : i32, i32
  }
  func.func @transform_2(%arg0: i32) -> (i32, i32) {
    %c0_i32 = arith.constant 0 : i32
    %c0_i32_0 = arith.constant 0 : i32
    return %arg0, %c0_i32 : i32, i32
  }
}

</mosaic_0001>

<llo_original>
// kernel: tpu_custom_call.1
$region0: #{tpu_custom_call.1}
  #allocation0 [shape = 'u32[]', space=smem, size = 0x4, offset = 0x4, fixed_abs, tag = 'smem constant byte address 0x4 - core index']
  #allocation1 [shape = 'u32[144,128]{1,0:T(1,128)}', space=vmem, size = 0x12000, scoped, tag = 'internal scratch']
  %s0 = inlined_call_operand.hbm [shape: f32[8,512], index: 0, kind: input, shape index: {}]
  %s1 = inlined_call_operand.hbm [shape: f32[8,512], index: 1, kind: input, shape index: {}]
  %s2 = inlined_call_operand.hbm [shape: f32[8,512], index: 2, kind: output, shape index: {}]
  %s3 = sld [smem:[#allocation0]]
  $region26: #{tpu_custom_call.1} parent=0
    _
  %s5 = ssub.s32 1, %s3
  %s6 = scalar_select 0, %s5, %s3
  $region1: #{tpu_custom_call.1} parent=0
    #allocation2 [shape = 'u8[16384]{0}', space=vmem, size = 0x4000, scoped, tag = 'input window, operand 0, single buffered']
    #allocation3 [shape = 's32[1]{0}', space=sflag, size = 0x4, scoped, tag = 'scoped memory for tpu_custom_call.1']
    #allocation4 [shape = 's32[1]{0}', space=sflag, size = 0x4, scoped, tag = 'scoped memory for tpu_custom_call.1']
    #allocation5 [shape = 'u8[16384]{0}', space=vmem, size = 0x4000, scoped, tag = 'input window, operand 1, single buffered']
    #allocation6 [shape = 's32[1]{0}', space=sflag, size = 0x4, scoped, tag = 'scoped memory for tpu_custom_call.1']
    #allocation7 [shape = 'u8[16384]{0}', space=vmem, size = 0x4000, scoped, tag = 'output window, operand 0, single buffered']
    %7 = vsyncpa [#allocation3], 0
    %8 = vsyncpa [#allocation6], 0
    %9 = vsyncpa [#allocation4], 0
    // Predicated region
    $region2: #{tpu_custom_call.1} parent=1 // pred_check
      _
    $region3: #{tpu_custom_call.1} parent=1 // pred_check_branch
      %11 = sbr.rel (0) target = $region5
    $region4: #{tpu_custom_call.1} parent=1 // pred_region
      %s13 = ssub.s32 512, 512
      %14 = vsyncadd [#allocation3], %s13
      %s16 = sshll.u32 [#allocation2], 4
      %s17 = int_to_ptr.vmem [resolvable:$true] %s16
      %19 = dma.hbm_to_vmem [thread:$0]  %s0, 512, %s17, [#allocation3]
    $region5: #{tpu_custom_call.1} parent=1 // pred_fallthru
      _
    // Predicated region
    $region6: #{tpu_custom_call.1} parent=1 // pred_check
      _
    $region7: #{tpu_custom_call.1} parent=1 // pred_check_branch
      %21 = sbr.rel (0) target = $region9
    $region8: #{tpu_custom_call.1} parent=1 // pred_region
      %s23 = ssub.s32 512, 512
      %24 = vsyncadd [#allocation6], %s23
      %s26 = sshll.u32 [#allocation5], 4
      %s27 = int_to_ptr.vmem [resolvable:$true] %s26
      %29 = dma.hbm_to_vmem [thread:$0]  %s1, 512, %s27, [#allocation6]
    $region9: #{tpu_custom_call.1} parent=1 // pred_fallthru
      _
    // Predicated region
    $region10: #{tpu_custom_call.1} parent=1 // pred_check
      _
    $region11: #{tpu_custom_call.1} parent=1 // pred_check_branch
      %31 = sbr.rel (0) target = $region13
    $region12: #{tpu_custom_call.1} parent=1 // pred_region
      %32 = dma.done [#allocation3], 512
    $region13: #{tpu_custom_call.1} parent=1 // pred_fallthru
      _
    // Predicated region
    $region14: #{tpu_custom_call.1} parent=1 // pred_check
      _
    $region15: #{tpu_custom_call.1} parent=1 // pred_check_branch
      %34 = sbr.rel (0) target = $region17
    $region16: #{tpu_custom_call.1} parent=1 // pred_region
      %35 = dma.done [#allocation6], 512
    $region17: #{tpu_custom_call.1} parent=1 // pred_fallthru
      _
    %v36 = vld [vmem:[#allocation2] sm:$0xff]
    %v37 = vld [vmem:[#allocation2 + $0x8] sm:$0xff]
    %v38 = vld [vmem:[#allocation2 + $0x10] sm:$0xff]
    %v39 = vld [vmem:[#allocation2 + $0x18] sm:$0xff]
    %v40 = vld [vmem:[#allocation5] sm:$0xff]
    %v41 = vld [vmem:[#allocation5 + $0x8] sm:$0xff]
    %v42 = vld [vmem:[#allocation5 + $0x10] sm:$0xff]
    %v43 = vld [vmem:[#allocation5 + $0x18] sm:$0xff]
    %v44 = vmul.f32 %v40, 1.442695
    %v45 = vpow.pop %v44
    %v46 = vmul.f32 %v41, 1.442695
    %v47 = vpow.pop %v46
    %v48 = vmul.f32 %v42, 1.442695
    %v49 = vpow.pop %v48
    %v50 = vmul.f32 %v43, 1.442695
    %v51 = vpow.pop %v50
    %v52 = vsub.f32 %v40, %v36
    %v53 = vsub.f32 %v41, %v37
    %v54 = vsub.f32 %v42, %v38
    %v55 = vsub.f32 %v43, %v39
    %v56 = vmul.f32 %v45, %v52
    %v57 = vmul.f32 %v47, %v53
    %v58 = vmul.f32 %v49, %v54
    %v59 = vmul.f32 %v51, %v55
    %60 = vst [vmem:[#allocation7] sm:$0xff] %v56
    %61 = vst [vmem:[#allocation7 + $0x8] sm:$0xff] %v57
    %62 = vst [vmem:[#allocation7 + $0x10] sm:$0xff] %v58
    %63 = vst [vmem:[#allocation7 + $0x18] sm:$0xff] %v59
    // Predicated region
    $region18: #{tpu_custom_call.1} parent=1 // pred_check
      _
    $region19: #{tpu_custom_call.1} parent=1 // pred_check_branch
      %65 = sbr.rel (0) target = $region21
    $region20: #{tpu_custom_call.1} parent=1 // pred_region
      %s67 = ssub.s32 512, 512
      %68 = vsyncadd [#allocation4], %s67
      %s70 = sshll.u32 [#allocation7], 4
      %s71 = int_to_ptr.vmem [resolvable:$true] %s70
      %73 = dma.vmem_to_hbm [thread:$0]  %s71, 512, %s2, [#allocation4]
    $region21: #{tpu_custom_call.1} parent=1 // pred_fallthru
      _
    // Predicated region
    $region22: #{tpu_custom_call.1} parent=1 // pred_check
      _
    $region23: #{tpu_custom_call.1} parent=1 // pred_check_branch
      %75 = sbr.rel (0) target = $region25
    $region24: #{tpu_custom_call.1} parent=1 // pred_region
      %76 = dma.done [#allocation4], 512
    $region25: #{tpu_custom_call.1} parent=1 // pred_fallthru
      _
    %77 = vsyncpa [#allocation3], 1
    %78 = vsyncpa [#allocation6], 1
    %79 = vsyncpa [#allocation4], 1

</llo_original>
